<compile_context>
chip_gen: v7x
topology: tpu7x:2x2x1
jax: 0.10.0
libtpu: 0.0.40
codegen_flags: <defaults>
</compile_context>

<pallas_src>
import functools

import jax
import jax.numpy as jnp
from jax.experimental import pallas as pl
from jax.experimental.pallas import tpu as pltpu

_LANE = 128  # vreg lane width (last dim)


def _sublane(dtype) -> int:
    # f32 -> 8, bf16 -> 16, int8/fp8 -> 32 (packed rows travel in groups)
    return max(8, 32 // jnp.dtype(dtype).itemsize)


def _scale_kernel(s_ref, o_ref, *, ratio):
    # effective_scale = s * (init / scale)  — one VPU multiply per tile.
    o_ref[...] = s_ref[...] * ratio


def scale_forward(
    s,
    *,
    scale: float = 1.0,
    init: float = 1.0,
    min_pallas_bytes: int = 1 << 20,
    tile_budget_bytes: int = 4 << 20,
):
    """Pallas forward of Scale: returns s * (init / scale).

    s: (heads, dim) float array (the learnable parameter).
    """
    ratio = float(init) / float(scale)
    h, d = s.shape
    dtype = s.dtype
    itemsize = jnp.dtype(dtype).itemsize
    nbytes = h * d * itemsize

    # ---- fast path: tiny tables are cheaper as one fused XLA vmul ----------
    if nbytes < min_pallas_bytes:
        return s * jnp.asarray(ratio, dtype)

    # ---- lane-dense 2D view without extra HBM copies -----------------------
    if d % _LANE == 0:
        rows, cols = h, d
        x2d = s
        restore = lambda y: y
    elif (h * d) % _LANE == 0:
        n = h * d
        cols = _LANE
        for c in (4096, 2048, 1024, 512, 256, 128):
            if n % c == 0:
                cols = c
                break
        rows = n // cols
        x2d = s.reshape(rows, cols)          # contiguous reshape: free
        restore = lambda y: y.reshape(h, d)  # free reshape back
    else:
        # last resort: pad the lane dim (one extra HBM pass each way)
        cols = pl.cdiv(d, _LANE) * _LANE
        rows = h
        x2d = jnp.pad(s, ((0, 0), (0, cols - d)))
        restore = lambda y: y[:, :d]

    # ---- tile sizing --------------------------------------------------------
    sub = _sublane(dtype)

    # Tile the lane dim only if even a minimal-height slab blows the budget.
    if sub * cols * itemsize > tile_budget_bytes:
        tile_cols = max(
            _LANE, (tile_budget_bytes // (sub * itemsize)) // _LANE * _LANE
        )
    else:
        tile_cols = cols

    tile_rows = max(
        sub, (tile_budget_bytes // (tile_cols * itemsize)) // sub * sub
    )

    if tile_rows >= rows:
        if rows >= 2 * sub and tile_cols == cols:
            # Split into >=2 row blocks so v7x megacore uses both TensorCores.
            tile_rows = pl.cdiv(pl.cdiv(rows, 2), sub) * sub
        else:
            tile_rows = rows  # full extent is always a legal block dim
    if tile_cols >= cols:
        tile_cols = cols

    grid = (pl.cdiv(rows, tile_rows), pl.cdiv(cols, tile_cols))

    out2d = pl.pallas_call(
        functools.partial(_scale_kernel, ratio=ratio),
        out_shape=jax.ShapeDtypeStruct((rows, cols), dtype),
        grid=grid,
        in_specs=[pl.BlockSpec((tile_rows, tile_cols), lambda i, j: (i, j))],
        out_specs=pl.BlockSpec((tile_rows, tile_cols), lambda i, j: (i, j)),
        compiler_params=pltpu.CompilerParams(
            # Independent elementwise tiles: shardable over v7x's two TCs;
            # harmless on single-TC v5e/v6e.
            dimension_semantics=("parallel", "parallel"),
            # 4 double-buffered buffers * 4 MiB = 16 MiB << 32 MiB on all gens
            # (explicitly raises v5e's 16 MiB scoped default).
            vmem_limit_bytes=32 * 1024 * 1024,
        ),
    )(x2d)

    return restore(out2d)


if __name__ == "__main__":
    key = jax.random.PRNGKey(0)
    k1, k2, k3 = jax.random.split(key, 3)

    def ref(s, scale, init):
        return s * (init / scale)

    checks = []

    # (1) module's natural small shape, forced through the Pallas kernel
    #     (4*32 = 128 elements -> free reshape to a (1, 128) lane-dense view).
    heads, dim = 4, 32
    scale_hp, init_hp = 2.0, 1.0
    s1 = (jnp.ones((heads, dim), jnp.float32) * scale_hp
          + 0.01 * jax.random.normal(k1, (heads, dim), jnp.float32))
    y1 = jax.block_until_ready(
        scale_forward(s1, scale=scale_hp, init=init_hp, min_pallas_bytes=0))
    checks.append((y1, ref(s1, scale_hp, init_hp)))

    # (2) lane-dense shape exercising the >=2 row-block split (grid=(2,1)).
    s2 = jax.random.normal(k2, (48, 256), jnp.float32)
    y2 = jax.block_until_ready(
        scale_forward(s2, scale=0.5, init=1.5, min_pallas_bytes=0))
    checks.append((y2, ref(s2, 0.5, 1.5)))

    # (3) awkward dim (100) that cannot be reshaped lane-dense -> pad fallback.
    s3 = jax.random.normal(k3, (12, 100), jnp.float32)
    y3 = jax.block_until_ready(
        scale_forward(s3, scale=1.0, init=0.25, min_pallas_bytes=0))
    checks.append((y3, ref(s3, 1.0, 0.25)))

    # (4) default call on the tiny table takes the plain-XLA fast path.
    y4 = jax.block_until_ready(scale_forward(s1, scale=scale_hp, init=init_hp))
    checks.append((y4, ref(s1, scale_hp, init_hp)))

    for y, r in checks:
        assert y.shape == r.shape, (y.shape, r.shape)
        assert y.dtype == r.dtype, (y.dtype, r.dtype)
        assert jnp.allclose(y, r, atol=1e-6, rtol=1e-6)

    print("KERNEL_OK")
</pallas_src>

<mosaic_0001>
module attributes {stable_mosaic.version = 11 : i64} {
  func.func @_scale_kernel(%arg0: i32, %arg1: i32, %arg2: memref<1x128xf32, #tpu.memory_space<vmem>>, %arg3: memref<1x128xf32, #tpu.memory_space<vmem>>) attributes {dimension_semantics = [#tpu.dimension_semantics<parallel>, #tpu.dimension_semantics<parallel>], iteration_bounds = array<i64: 1, 1>, scalar_prefetch = 0 : i64, scratch_operands = 0 : i64, tpu.core_type = #tpu.core_type<tc>, window_params = [{transform_indices = @transform_0, window_bounds = array<i64: 1, 128>}, {transform_indices = @transform_1, window_bounds = array<i64: 1, 128>}]} {
    %c0 = arith.constant 0 : index
    %c0_0 = arith.constant 0 : index
    %0 = vector.load %arg2[%c0, %c0_0] : memref<1x128xf32, #tpu.memory_space<vmem>>, vector<1x128xf32>
    %cst = arith.constant 5.000000e-01 : f32
    %1 = vector.broadcast %cst : f32 to vector<1x128xf32>
    %2 = arith.mulf %0, %1 : vector<1x128xf32>
    %c0_1 = arith.constant 0 : index
    %c0_2 = arith.constant 0 : index
    %3 = vector.load %arg3[%c0_1, %c0_2] : memref<1x128xf32, #tpu.memory_space<vmem>>, vector<1x128xf32>
    tpu.vector_store %arg3[%c0_1, %c0_2], %2 {strides = array<i32>} : memref<1x128xf32, #tpu.memory_space<vmem>>, vector<1x128xf32>,
    return
  }
  func.func @transform_0(%arg0: i32, %arg1: i32) -> (i32, i32) {
    %c0_i32 = arith.constant 0 : i32
    return %arg0, %arg1 : i32, i32
  }
  func.func @transform_1(%arg0: i32, %arg1: i32) -> (i32, i32) {
    %c0_i32 = arith.constant 0 : i32
    return %arg0, %arg1 : i32, i32
  }
}

</mosaic_0001>

<llo_original>
// kernel: tpu_custom_call.1
$region0: #{tpu_custom_call.1}
  #allocation0 [shape = 'u32[]', space=smem, size = 0x4, offset = 0x4, fixed_abs, tag = 'smem constant byte address 0x4 - core index']
  #allocation1 [shape = 'u32[144,128]{1,0:T(1,128)}', space=vmem, size = 0x12000, scoped, tag = 'internal scratch']
  %s0 = inlined_call_operand.hbm [shape: f32[1,128], index: 0, kind: input, shape index: {}]
  %s1 = inlined_call_operand.hbm [shape: f32[1,128], index: 1, kind: output, shape index: {}]
  %s2 = sld [smem:[#allocation0]]
  $region18: #{tpu_custom_call.1} parent=0
    _
  %s4 = ssub.s32 1, %s2
  %s5 = scalar_select 0, %s4, %s2
  $region1: #{tpu_custom_call.1} parent=0
    #allocation2 [shape = 'u8[512]{0}', space=vmem, size = 0x400, scoped, tag = 'input window, operand 0, single buffered']
    #allocation3 [shape = 's32[1]{0}', space=sflag, size = 0x4, scoped, tag = 'scoped memory for tpu_custom_call.1']
    #allocation4 [shape = 's32[1]{0}', space=sflag, size = 0x4, scoped, tag = 'scoped memory for tpu_custom_call.1']
    #allocation5 [shape = 'u8[512]{0}', space=vmem, size = 0x400, scoped, tag = 'output window, operand 0, single buffered']
    %6 = vsyncpa [#allocation3], 0
    %7 = vsyncpa [#allocation4], 0
    // Predicated region
    $region2: #{tpu_custom_call.1} parent=1 // pred_check
      _
    $region3: #{tpu_custom_call.1} parent=1 // pred_check_branch
      %9 = sbr.rel (0) target = $region5
    $region4: #{tpu_custom_call.1} parent=1 // pred_region
      %s11 = ssub.s32 16, 16
      %12 = vsyncadd [#allocation3], %s11
      %s14 = sshll.u32 [#allocation2], 4
      %s15 = int_to_ptr.vmem [resolvable:$true] %s14
      %17 = dma.hbm_to_vmem [thread:$0]  %s0, 16, %s15, [#allocation3]
    $region5: #{tpu_custom_call.1} parent=1 // pred_fallthru
      _
    // Predicated region
    $region6: #{tpu_custom_call.1} parent=1 // pred_check
      _
    $region7: #{tpu_custom_call.1} parent=1 // pred_check_branch
      %19 = sbr.rel (0) target = $region9
    $region8: #{tpu_custom_call.1} parent=1 // pred_region
      %20 = dma.done [#allocation3], 16
    $region9: #{tpu_custom_call.1} parent=1 // pred_fallthru
      _
    %v21 = vld [vmem:[#allocation2] sm:$0x1]
    %v22 = vmul.f32 %v21, 0.5
    %23 = vst [vmem:[#allocation5] sm:$0x1] %v22
    // Predicated region
    $region10: #{tpu_custom_call.1} parent=1 // pred_check
      _
    $region11: #{tpu_custom_call.1} parent=1 // pred_check_branch
      %25 = sbr.rel (0) target = $region13
    $region12: #{tpu_custom_call.1} parent=1 // pred_region
      %s27 = ssub.s32 16, 16
      %28 = vsyncadd [#allocation4], %s27
      %s30 = sshll.u32 [#allocation5], 4
      %s31 = int_to_ptr.vmem [resolvable:$true] %s30
      %33 = dma.vmem_to_hbm [thread:$0]  %s31, 16, %s1, [#allocation4]
    $region13: #{tpu_custom_call.1} parent=1 // pred_fallthru
      _
    // Predicated region
    $region14: #{tpu_custom_call.1} parent=1 // pred_check
      _
    $region15: #{tpu_custom_call.1} parent=1 // pred_check_branch
      %35 = sbr.rel (0) target = $region17
    $region16: #{tpu_custom_call.1} parent=1 // pred_region
      %36 = dma.done [#allocation4], 16
    $region17: #{tpu_custom_call.1} parent=1 // pred_fallthru
      _
    %37 = vsyncpa [#allocation3], 1
    %38 = vsyncpa [#allocation4], 1

</llo_original>
